<compile_context>
chip_gen: v5e
topology: v5e:2x2
jax: 0.10.0
libtpu: 0.0.40
codegen_flags: <defaults>
</compile_context>

<pallas_src>
import functools

import jax
import jax.numpy as jnp
from jax.experimental import pallas as pl
from jax.experimental.pallas import tpu as pltpu


def _round_up(x, m):
    return (x + m - 1) // m * m


def _resnext_kernel(x_ref, wc_ref, w2_ref, wf_ref, o_ref, *, Wp, S_cols, n_relu):
    # x_ref : (1, C_in, S_pad)         pre-padded input, flat spatial on lanes
    # wc_ref: (card*gw + C_out, C_in)  stacked [per-path 1x1 convs ; identity 1x1]
    # w2_ref: (card*4, 9*card*gw)      im2col 3x3 weight (tap-major, block-diag/group)
    # wf_ref: (C_out, card*4)          final 1x1 conv
    # o_ref : (1, C_out, S_cols)       lane-dense output slab (trimmed in wrapper)
    xp = x_ref[0]                                           # (C_in, S_pad)

    # Stage 1 + identity 1x1 fused into ONE MXU matmul.
    z = jnp.dot(wc_ref[...], xp, preferred_element_type=jnp.float32)
    y1 = jnp.maximum(z[:n_relu], 0.0)                       # (card*gw, S_pad)
    ident = z[n_relu:, Wp + 1: Wp + 1 + S_cols]             # (C_out, S_cols)

    # Stage 2: all per-path 3x3 convs (padding=1) as a single im2col matmul.
    # Tap (ky, kx) is the contiguous flat lane slice starting at ky*Wp + kx.
    patches = jnp.concatenate(
        [y1[:, ky * Wp + kx: ky * Wp + kx + S_cols]
         for ky in range(3) for kx in range(3)],
        axis=0)                                             # (9*card*gw, S_cols)
    y2 = jnp.maximum(
        jnp.dot(w2_ref[...], patches, preferred_element_type=jnp.float32), 0.0)

    # Stage 3: final 1x1 conv + residual (identity computed in stage 1).
    o_ref[0] = jnp.dot(wf_ref[...], y2,
                       preferred_element_type=jnp.float32) + ident


def resnext_block_pallas(x_nchw, w1, w2, wf, wi):
    """x_nchw: (N, C_in, H, W) float32. PyTorch-layout weights:
       w1: (card, gw, C_in, 1, 1)   w2: (card, 4, gw, 3, 3)
       wf: (C_out, card*4, 1, 1)    wi: (C_out, C_in, 1, 1)
    Returns (N, C_out, H, W)."""
    N, C_in, H, W = x_nchw.shape
    card, gw = w1.shape[0], w1.shape[1]
    C_out = wf.shape[0]
    Wp = W + 2
    S_cols = _round_up(H * Wp, 128)              # lane-dense output slab width
    max_off = 2 * Wp + 2                         # largest static tap offset
    S_pad = _round_up(max((H + 2) * Wp, max_off + S_cols), 128)

    x = x_nchw.astype(jnp.float32)
    # 1-pixel zero halo, flatten spatial onto lanes, then zero-pad the flat
    # tail so every static tap slice of width S_cols stays in range.
    xpad = jnp.pad(x, ((0, 0), (0, 0), (1, 1), (1, 1)))
    xflat = jnp.pad(xpad.reshape(N, C_in, (H + 2) * Wp),
                    ((0, 0), (0, 0), (0, S_pad - (H + 2) * Wp)))

    # ---- weight repacking (wrapper side, negligible) ----
    # Stage 1 + identity: stack path 1x1 weights and identity 1x1 weight.
    w1_k = w1[:, :, :, 0, 0].reshape(card * gw, C_in)
    wi_k = wi[:, :, 0, 0]
    wc_k = jnp.concatenate([w1_k, wi_k], axis=0).astype(jnp.float32)
    # Stage 2 im2col weight (card*4, 9*card*gw): tap-major column blocks,
    # block-diagonal across groups inside each tap block.
    w2_t = jnp.transpose(w2, (3, 4, 0, 1, 2)).reshape(9, card, 4, gw)  # [t,g,o,i]
    w2_k = jnp.einsum('tgoi,gh->gothi', w2_t, jnp.eye(card, dtype=w2.dtype))
    w2_k = w2_k.reshape(card * 4, 9 * card * gw).astype(jnp.float32)
    wf_k = wf[:, :, 0, 0].astype(jnp.float32)                # (C_out, card*4)

    kernel = functools.partial(_resnext_kernel, Wp=Wp, S_cols=S_cols,
                               n_relu=card * gw)

    # TODO(synk): for v7x with N==1, add a second parallel grid axis over row
    # halves (halo pre-duplicated in the wrapper) so both TensorCores are busy;
    # at N>=2 the batch axis already shards across TCs.
    out_flat = pl.pallas_call(
        kernel,
        out_shape=jax.ShapeDtypeStruct((N, C_out, S_cols), jnp.float32),
        grid=(N,),
        in_specs=[
            pl.BlockSpec((1, C_in, S_pad), lambda n: (n, 0, 0)),
            pl.BlockSpec((card * gw + C_out, C_in), lambda n: (0, 0)),
            pl.BlockSpec((card * 4, 9 * card * gw), lambda n: (0, 0)),
            pl.BlockSpec((C_out, card * 4), lambda n: (0, 0)),
        ],
        out_specs=pl.BlockSpec((1, C_out, S_cols), lambda n: (n, 0, 0)),
        compiler_params=pltpu.CompilerParams(
            dimension_semantics=("parallel",)),
    )(xflat, wc_k, w2_k, wf_k)

    # Trim trailing lane padding and the two halo columns per row (NCHW out).
    return out_flat[:, :, :H * Wp].reshape(N, C_out, H, Wp)[:, :, :, :W]


def resnext_block_ref(x_nchw, w1, w2, wf, wi):
    """Pure-JAX reference mirroring the PyTorch module (NCHW convs)."""
    dn = ("NCHW", "OIHW", "NCHW")
    card = w1.shape[0]
    paths = []
    for g in range(card):
        t = jax.lax.conv_general_dilated(x_nchw, w1[g], (1, 1), "VALID",
                                         dimension_numbers=dn)
        t = jnp.maximum(t, 0.0)
        t = jax.lax.conv_general_dilated(t, w2[g], (1, 1), ((1, 1), (1, 1)),
                                         dimension_numbers=dn)
        t = jnp.maximum(t, 0.0)
        paths.append(t)
    out = jnp.concatenate(paths, axis=1)
    out = jax.lax.conv_general_dilated(out, wf, (1, 1), "VALID",
                                       dimension_numbers=dn)
    ident = jax.lax.conv_general_dilated(x_nchw, wi, (1, 1), "VALID",
                                         dimension_numbers=dn)
    return out + ident


if __name__ == "__main__":
    # Small shapes implied by the module: in_channels divisible by cardinality.
    N, C_in, H, W = 2, 8, 16, 16
    cardinality = 2
    C_out = 8
    gw = C_in // cardinality

    key = jax.random.PRNGKey(0)
    kx, k1, k2, kf, ki = jax.random.split(key, 5)

    x = jax.random.normal(kx, (N, C_in, H, W), jnp.float32)
    # deterministic synthetic weights in PyTorch Conv2d layout (O, I, kh, kw)
    w1 = 0.1 * jax.random.normal(k1, (cardinality, gw, C_in, 1, 1), jnp.float32)
    w2 = 0.1 * jax.random.normal(k2, (cardinality, 4, gw, 3, 3), jnp.float32)
    wf = 0.1 * jax.random.normal(kf, (C_out, cardinality * 4, 1, 1), jnp.float32)
    wi = 0.1 * jax.random.normal(ki, (C_out, C_in, 1, 1), jnp.float32)

    out = resnext_block_pallas(x, w1, w2, wf, wi)
    out = jax.block_until_ready(out)

    ref = jax.block_until_ready(resnext_block_ref(x, w1, w2, wf, wi))
    assert out.shape == (N, C_out, H, W)
    assert jnp.allclose(out, ref, atol=1e-4, rtol=1e-4), \
        f"max abs err = {jnp.max(jnp.abs(out - ref))}"

    print("KERNEL_OK")
</pallas_src>

<mosaic_0001>
module attributes {stable_mosaic.version = 11 : i64} {
  func.func @_resnext_kernel(%arg0: i32, %arg1: memref<1x8x512xf32, #tpu.memory_space<vmem>>, %arg2: memref<16x8xf32, #tpu.memory_space<vmem>>, %arg3: memref<8x72xf32, #tpu.memory_space<vmem>>, %arg4: memref<8x8xf32, #tpu.memory_space<vmem>>, %arg5: memref<1x8x384xf32, #tpu.memory_space<vmem>>) attributes {dimension_semantics = [#tpu.dimension_semantics<parallel>], iteration_bounds = array<i64: 2>, scalar_prefetch = 0 : i64, scratch_operands = 0 : i64, tpu.core_type = #tpu.core_type<tc>, window_params = [{transform_indices = @transform_0, window_bounds = array<i64: 1, 8, 512>}, {pipeline_mode = #tpu.pipeline_mode<synchronous>, transform_indices = @transform_1, window_bounds = array<i64: 16, 8>}, {pipeline_mode = #tpu.pipeline_mode<synchronous>, transform_indices = @transform_2, window_bounds = array<i64: 8, 72>}, {pipeline_mode = #tpu.pipeline_mode<synchronous>, transform_indices = @transform_3, window_bounds = array<i64: 8, 8>}, {transform_indices = @transform_4, window_bounds = array<i64: 1, 8, 384>}]} {
    %c0 = arith.constant 0 : index
    %c0_0 = arith.constant 0 : index
    %c0_1 = arith.constant 0 : index
    %0 = vector.load %arg1[%c0, %c0_0, %c0_1] : memref<1x8x512xf32, #tpu.memory_space<vmem>>, vector<1x8x512xf32>
    %1 = vector.shape_cast %0 : vector<1x8x512xf32> to vector<8x512xf32>
    %c0_2 = arith.constant 0 : index
    %c0_3 = arith.constant 0 : index
    %2 = vector.load %arg2[%c0_2, %c0_3] : memref<16x8xf32, #tpu.memory_space<vmem>>, vector<16x8xf32>
    %cst = arith.constant dense<0.000000e+00> : vector<16x512xf32>
    %3 = tpu.matmul %2, %1, %cst {dimension_numbers = #tpu.dot_dimension_numbers<[1], [0], [0], [1], [0, 0, 1, 1], [], []>} : vector<16x8xf32>, vector<8x512xf32>, vector<16x512xf32> -> vector<16x512xf32>
    %4 = vector.extract_strided_slice %3 {offsets = [0, 0], sizes = [8, 512], strides = [1, 1]} : vector<16x512xf32> to vector<8x512xf32>
    %cst_4 = arith.constant 0.000000e+00 : f32
    %5 = vector.broadcast %cst_4 : f32 to vector<8x512xf32>
    %6 = arith.maximumf %4, %5 : vector<8x512xf32>
    %7 = vector.extract_strided_slice %3 {offsets = [8, 19], sizes = [8, 384], strides = [1, 1]} : vector<16x512xf32> to vector<8x384xf32>
    %8 = vector.extract_strided_slice %6 {offsets = [0, 0], sizes = [8, 384], strides = [1, 1]} : vector<8x512xf32> to vector<8x384xf32>
    %9 = vector.extract_strided_slice %6 {offsets = [0, 1], sizes = [8, 384], strides = [1, 1]} : vector<8x512xf32> to vector<8x384xf32>
    %10 = vector.extract_strided_slice %6 {offsets = [0, 2], sizes = [8, 384], strides = [1, 1]} : vector<8x512xf32> to vector<8x384xf32>
    %11 = vector.extract_strided_slice %6 {offsets = [0, 18], sizes = [8, 384], strides = [1, 1]} : vector<8x512xf32> to vector<8x384xf32>
    %12 = vector.extract_strided_slice %6 {offsets = [0, 19], sizes = [8, 384], strides = [1, 1]} : vector<8x512xf32> to vector<8x384xf32>
    %13 = vector.extract_strided_slice %6 {offsets = [0, 20], sizes = [8, 384], strides = [1, 1]} : vector<8x512xf32> to vector<8x384xf32>
    %14 = vector.extract_strided_slice %6 {offsets = [0, 36], sizes = [8, 384], strides = [1, 1]} : vector<8x512xf32> to vector<8x384xf32>
    %15 = vector.extract_strided_slice %6 {offsets = [0, 37], sizes = [8, 384], strides = [1, 1]} : vector<8x512xf32> to vector<8x384xf32>
    %16 = vector.extract_strided_slice %6 {offsets = [0, 38], sizes = [8, 384], strides = [1, 1]} : vector<8x512xf32> to vector<8x384xf32>
    %17 = tpu.concatenate %8, %9, %10, %11, %12, %13, %14, %15, %16 in 0 : vector<8x384xf32>, vector<8x384xf32>, vector<8x384xf32>, vector<8x384xf32>, vector<8x384xf32>, vector<8x384xf32>, vector<8x384xf32>, vector<8x384xf32>, vector<8x384xf32> -> vector<72x384xf32>
    %c0_5 = arith.constant 0 : index
    %c0_6 = arith.constant 0 : index
    %18 = vector.load %arg3[%c0_5, %c0_6] : memref<8x72xf32, #tpu.memory_space<vmem>>, vector<8x72xf32>
    %cst_7 = arith.constant dense<0.000000e+00> : vector<8x384xf32>
    %19 = tpu.matmul %18, %17, %cst_7 {dimension_numbers = #tpu.dot_dimension_numbers<[1], [0], [0], [1], [0, 0, 1, 1], [], []>} : vector<8x72xf32>, vector<72x384xf32>, vector<8x384xf32> -> vector<8x384xf32>
    %cst_8 = arith.constant 0.000000e+00 : f32
    %20 = vector.broadcast %cst_8 : f32 to vector<8x384xf32>
    %21 = arith.maximumf %19, %20 : vector<8x384xf32>
    %c0_9 = arith.constant 0 : index
    %c0_10 = arith.constant 0 : index
    %22 = vector.load %arg4[%c0_9, %c0_10] : memref<8x8xf32, #tpu.memory_space<vmem>>, vector<8x8xf32>
    %cst_11 = arith.constant dense<0.000000e+00> : vector<8x384xf32>
    %23 = tpu.matmul %22, %21, %cst_11 {dimension_numbers = #tpu.dot_dimension_numbers<[1], [0], [0], [1], [0, 0, 1, 1], [], []>} : vector<8x8xf32>, vector<8x384xf32>, vector<8x384xf32> -> vector<8x384xf32>
    %24 = arith.addf %23, %7 : vector<8x384xf32>
    %c0_12 = arith.constant 0 : index
    %c0_13 = arith.constant 0 : index
    %c0_14 = arith.constant 0 : index
    %25 = vector.load %arg5[%c0_12, %c0_13, %c0_14] : memref<1x8x384xf32, #tpu.memory_space<vmem>>, vector<1x8x384xf32>
    %26 = vector.shape_cast %25 : vector<1x8x384xf32> to vector<8x384xf32>
    %27 = vector.shape_cast %24 : vector<8x384xf32> to vector<1x8x384xf32>
    tpu.vector_store %arg5[%c0_12, %c0_13, %c0_14], %27 {strides = array<i32>} : memref<1x8x384xf32, #tpu.memory_space<vmem>>, vector<1x8x384xf32>,
    return
  }
  func.func @transform_0(%arg0: i32) -> (i32, i32, i32) {
    %c0_i32 = arith.constant 0 : i32
    %c0_i32_0 = arith.constant 0 : i32
    %c0_i32_1 = arith.constant 0 : i32
    return %arg0, %c0_i32, %c0_i32_0 : i32, i32, i32
  }
  func.func @transform_1(%arg0: i32) -> (i32, i32) {
    %c0_i32 = arith.constant 0 : i32
    %c0_i32_0 = arith.constant 0 : i32
    %c0_i32_1 = arith.constant 0 : i32
    return %c0_i32, %c0_i32_0 : i32, i32
  }
  func.func @transform_2(%arg0: i32) -> (i32, i32) {
    %c0_i32 = arith.constant 0 : i32
    %c0_i32_0 = arith.constant 0 : i32
    %c0_i32_1 = arith.constant 0 : i32
    return %c0_i32, %c0_i32_0 : i32, i32
  }
  func.func @transform_3(%arg0: i32) -> (i32, i32) {
    %c0_i32 = arith.constant 0 : i32
    %c0_i32_0 = arith.constant 0 : i32
    %c0_i32_1 = arith.constant 0 : i32
    return %c0_i32, %c0_i32_0 : i32, i32
  }
  func.func @transform_4(%arg0: i32) -> (i32, i32, i32) {
    %c0_i32 = arith.constant 0 : i32
    %c0_i32_0 = arith.constant 0 : i32
    %c0_i32_1 = arith.constant 0 : i32
    return %arg0, %c0_i32, %c0_i32_0 : i32, i32, i32
  }
}

</mosaic_0001>

<llo_original>
// kernel: tpu_custom_call.1
$region0: #{tpu_custom_call.1}
  #allocation0 [shape = 'u32[]', space=smem, size = 0x4, offset = 0x4, fixed_abs, tag = 'smem constant byte address 0x4 - core index']
  #allocation1 [shape = 'u32[72,128]{1,0:T(1,128)}', space=vmem, size = 0x9000, scoped, tag = 'internal scratch']
  %s0 = inlined_call_operand.hbm [shape: f32[2,8,512], index: 0, kind: input, shape index: {}]
  %s1 = inlined_call_operand.vmem [shape: f32[16,8], index: 1, kind: input, shape index: {}]
  %s2 = inlined_call_operand.vmem [shape: f32[8,72], index: 2, kind: input, shape index: {}]
  %s3 = inlined_call_operand.vmem [shape: f32[8,8], index: 3, kind: input, shape index: {}]
  %s4 = inlined_call_operand.hbm [shape: f32[2,8,384], index: 4, kind: output, shape index: {}]
  %s5 = sld [smem:[#allocation0]]
  $region53: #{tpu_custom_call.1} parent=0
    _
  %s7 = ssub.s32 1, %s5
  %s8 = scalar_select 0, %s7, %s5
  $region1: #{tpu_custom_call.1} parent=0
    #allocation2 [shape = 'u8[32768]{0}', space=vmem, size = 0x8000, scoped, tag = 'input window, operand 0']
    #allocation3 [shape = 's32[2]{0}', space=sflag, size = 0x8, scoped, tag = 'scoped memory for tpu_custom_call.1']
    #allocation4 [shape = 's32[2]{0}', space=sflag, size = 0x8, scoped, tag = 'scoped memory for tpu_custom_call.1']
    #allocation5 [shape = 'u8[24576]{0}', space=vmem, size = 0x6000, scoped, tag = 'output window, operand 0']
    %9 = vsyncpa [#allocation3], 0
    %s10 = scalar_lea.sflag [#allocation3], 1
    %11 = vsyncpa %s10, 0
    %12 = vsyncpa [#allocation4], 0
    %s13 = scalar_lea.sflag [#allocation4], 1
    %14 = vsyncpa %s13, 0
    loop: start=0, step=1, limit=4
    $region2: #{tpu_custom_call.1} parent=1 // loop_pre_header
      _
    $region3: #{tpu_custom_call.1} parent=1 // loop_header
      %s16 = sphi 0, %s20
      %p17 = scmp.ge.s32.totalorder %s16, 4
      %s26 = sphi 0, %s28
      %s29 = sphi 0, %s26
      %s30 = sphi 0, %s29
      %s46 = sphi 0, %s30
      %s50 = sphi 0, %s50
      %s52 = sphi 0, %s50
      %s53 = sphi 0, %s52
      %s67 = sphi 0, %s53
      %s71 = sphi 0, %s71
      %s73 = sphi 0, %s71
      %s74 = sphi 0, %s73
      %s88 = sphi 0, %s74
      %s92 = sphi 0, %s92
      %s94 = sphi 0, %s92
      %s95 = sphi 0, %s94
      %s109 = sphi 0, %s95
      %s115 = sphi 0, %s117
      %s118 = sphi 0, %s115
      %s119 = sphi 0, %s118
      %s135 = sphi 0, %s119
    $region4: #{tpu_custom_call.1} parent=1 // loop_header_branch
      %19 = sbr.rel (%p17) target = $region8
    $region5: #{tpu_custom_call.1} parent=1 // loop_body
      %s21 = ssub.s32 %s16, 1
      %s22 = ssub.s32 %s16, 2
      %s23 = sadd.s32 %s16, 1
      %s24 = ssub.s32 %s16, %s23
      %p25 = scmp.eq.s32.totalorder %s24, 0
      %s27 = sadd.s32 %s26, 1
      %s28 = scalar_select %p25, %s26, %s27
      %p31 = pneg %p25
      %p32 = scmp.eq.s32.totalorder %s16, 1
      %p33 = por %p31, %p32
      %p34 = scmp.ne.s32.totalorder %s26, %s29
      %p35 = scmp.eq.s32.totalorder %s16, 0
      %p36 = por %p34, %p35
      %p37 = scmp.ne.s32.totalorder %s26, %s29
      %p38 = scmp.eq.s32.totalorder %s21, 1
      %p39 = por %p37, %p38
      %p40 = scmp.ne.s32.totalorder %s29, %s30
      %p41 = scmp.eq.s32.totalorder %s21, 0
      %p42 = por %p40, %p41
      %p43 = scmp.ne.s32.totalorder %s29, %s30
      %p44 = scmp.eq.s32.totalorder %s22, 1
      %p45 = por %p43, %p44
      %p47 = scmp.ne.s32.totalorder %s30, %s46
      %p48 = scmp.eq.s32.totalorder %s22, 0
      %p49 = por %p47, %p48
      %s51 = sadd.s32 %s50, 1
      %p54 = scmp.eq.s32.totalorder %s16, 1
      %p55 = scmp.ne.s32.totalorder %s50, %s52
      %p56 = scmp.eq.s32.totalorder %s16, 0
      %p57 = por %p55, %p56
      %p58 = scmp.ne.s32.totalorder %s50, %s52
      %p59 = scmp.eq.s32.totalorder %s21, 1
      %p60 = por %p58, %p59
      %p61 = scmp.ne.s32.totalorder %s52, %s53
      %p62 = scmp.eq.s32.totalorder %s21, 0
      %p63 = por %p61, %p62
      %p64 = scmp.ne.s32.totalorder %s52, %s53
      %p65 = scmp.eq.s32.totalorder %s22, 1
      %p66 = por %p64, %p65
      %p68 = scmp.ne.s32.totalorder %s53, %s67
      %p69 = scmp.eq.s32.totalorder %s22, 0
      %p70 = por %p68, %p69
      %s72 = sadd.s32 %s71, 1
      %p75 = scmp.eq.s32.totalorder %s16, 1
      %p76 = scmp.ne.s32.totalorder %s71, %s73
      %p77 = scmp.eq.s32.totalorder %s16, 0
      %p78 = por %p76, %p77
      %p79 = scmp.ne.s32.totalorder %s71, %s73
      %p80 = scmp.eq.s32.totalorder %s21, 1
      %p81 = por %p79, %p80
      %p82 = scmp.ne.s32.totalorder %s73, %s74
      %p83 = scmp.eq.s32.totalorder %s21, 0
      %p84 = por %p82, %p83
      %p85 = scmp.ne.s32.totalorder %s73, %s74
      %p86 = scmp.eq.s32.totalorder %s22, 1
      %p87 = por %p85, %p86
      %p89 = scmp.ne.s32.totalorder %s74, %s88
      %p90 = scmp.eq.s32.totalorder %s22, 0
      %p91 = por %p89, %p90
      %s93 = sadd.s32 %s92, 1
      %p96 = scmp.eq.s32.totalorder %s16, 1
      %p97 = scmp.ne.s32.totalorder %s92, %s94
      %p98 = scmp.eq.s32.totalorder %s16, 0
      %p99 = por %p97, %p98
      %p100 = scmp.ne.s32.totalorder %s92, %s94
      %p101 = scmp.eq.s32.totalorder %s21, 1
      %p102 = por %p100, %p101
      %p103 = scmp.ne.s32.totalorder %s94, %s95
      %p104 = scmp.eq.s32.totalorder %s21, 0
      %p105 = por %p103, %p104
      %p106 = scmp.ne.s32.totalorder %s94, %s95
      %p107 = scmp.eq.s32.totalorder %s22, 1
      %p108 = por %p106, %p107
      %p110 = scmp.ne.s32.totalorder %s95, %s109
      %p111 = scmp.eq.s32.totalorder %s22, 0
      %p112 = por %p110, %p111
      %s113 = ssub.s32 %s16, %s23
      %p114 = scmp.eq.s32.totalorder %s113, 0
      %s116 = sadd.s32 %s115, 1
      %s117 = scalar_select %p114, %s115, %s116
      %p120 = pneg %p114
      %p121 = scmp.eq.s32.totalorder %s16, 1
      %p122 = por %p120, %p121
      %p123 = scmp.ne.s32.totalorder %s115, %s118
      %p124 = scmp.eq.s32.totalorder %s16, 0
      %p125 = por %p123, %p124
      %p126 = scmp.ne.s32.totalorder %s115, %s118
      %p127 = scmp.eq.s32.totalorder %s21, 1
      %p128 = por %p126, %p127
      %p129 = scmp.ne.s32.totalorder %s118, %s119
      %p130 = scmp.eq.s32.totalorder %s21, 0
      %p131 = por %p129, %p130
      %p132 = scmp.ne.s32.totalorder %s118, %s119
      %p133 = scmp.eq.s32.totalorder %s22, 1
      %p134 = por %p132, %p133
      %p136 = scmp.ne.s32.totalorder %s119, %s135
      %p137 = scmp.eq.s32.totalorder %s22, 0
      %p138 = por %p136, %p137
      %p139 = scmp.le.s32.totalorder 1, %s16
      %p140 = scmp.lt.s32.totalorder %s16, 3
      %p141 = pnand %p139, %p140
      %p142 = pneg %p141
      // Predicated region
      $region9: #{tpu_custom_call.1} parent=5 // pred_check
        _
      $region10: #{tpu_custom_call.1} parent=5 // pred_check_branch
        %144 = sbr.rel (%p141) target = $region12
      $region11: #{tpu_custom_call.1} parent=5 // pred_region
        %s145 = ssub.s32 %s16, 1
        // Predicated region
        $region13: #{tpu_custom_call.1} parent=11 // pred_check
          %p146 = pneg %p63
        $region14: #{tpu_custom_call.1} parent=11 // pred_check_branch
          %148 = sbr.rel (%p146) target = $region16
        $region15: #{tpu_custom_call.1} parent=11 // pred_region
          _
        $region16: #{tpu_custom_call.1} parent=11 // pred_fallthru
          _
        // Predicated region
        $region17: #{tpu_custom_call.1} parent=11 // pred_check
          %p149 = pneg %p84
        $region18: #{tpu_custom_call.1} parent=11 // pred_check_branch
          %151 = sbr.rel (%p149) target = $region20
        $region19: #{tpu_custom_call.1} parent=11 // pred_region
          _
        $region20: #{tpu_custom_call.1} parent=11 // pred_fallthru
          _
        // Predicated region
        $region21: #{tpu_custom_call.1} parent=11 // pred_check
          %p152 = pneg %p105
        $region22: #{tpu_custom_call.1} parent=11 // pred_check_branch
          %154 = sbr.rel (%p152) target = $region24
        $region23: #{tpu_custom_call.1} parent=11 // pred_region
          _
        $region24: #{tpu_custom_call.1} parent=11 // pred_fallthru
          _
      $region12: #{tpu_custom_call.1} parent=5 // pred_fallthru
        _
      %p155 = scmp.lt.s32.totalorder %s16, 2
      // Predicated region
      $region25: #{tpu_custom_call.1} parent=5 // pred_check
        %p156 = pneg %p155
      $region26: #{tpu_custom_call.1} parent=5 // pred_check_branch
        %158 = sbr.rel (%p156) target = $region28
      $region27: #{tpu_custom_call.1} parent=5 // pred_region
        // Predicated region
        $region29: #{tpu_custom_call.1} parent=27 // pred_check
          %p159 = pneg %p36
        $region30: #{tpu_custom_call.1} parent=27 // pred_check_branch
          %161 = sbr.rel (%p159) target = $region32
        $region31: #{tpu_custom_call.1} parent=27 // pred_region
          %s162 = sand.u32 %s26, 1
          %s163 = scalar_lea.sflag [#allocation3], %s162
          %s164 = sand.u32 %s26, 1
          %s165 = smul.addr %s164, 32
          %s166 = scalar_lea.vmem [#allocation2], %s165
          %168 = vsyncadd %s163, 0
          %s169 = smul.addr %s16, 4
          %s170 = smul.addr %s169, 8
          %s171 = scalar_lea.hbm %s0, %s170
          %s173 = sshll.u32 %s171, 4
          %s174 = int_to_ptr.hbm [resolvable:$true] %s173
          %s175 = sshll.u32 %s166, 4
          %s176 = int_to_ptr.vmem [resolvable:$true] %s175
          %178 = dma.hbm_to_vmem [thread:$0]  %s174, 512, %s176, %s163
        $region32: #{tpu_custom_call.1} parent=27 // pred_fallthru
          _
      $region28: #{tpu_custom_call.1} parent=5 // pred_fallthru
        _
      %p179 = scmp.le.s32.totalorder 1, %s16
      %p180 = scmp.lt.s32.totalorder %s16, 3
      %p181 = pnand %p179, %p180
      %p182 = pneg %p181
      // Predicated region
      $region33: #{tpu_custom_call.1} parent=5 // pred_check
        _
      $region34: #{tpu_custom_call.1} parent=5 // pred_check_branch
        %184 = sbr.rel (%p181) target = $region36
      $region35: #{tpu_custom_call.1} parent=5 // pred_region
        %s185 = ssub.s32 %s16, 1
        %s186 = sand.u32 %s29, 1
        %s187 = scalar_lea.sflag [#allocation3], %s186
        %s188 = sand.u32 %s29, 1
        %s189 = smul.addr %s188, 32
        %s190 = scalar_lea.vmem [#allocation2], %s189
        // Predicated region
        $region37: #{tpu_custom_call.1} parent=35 // pred_check
          %p191 = pneg %p42
        $region38: #{tpu_custom_call.1} parent=35 // pred_check_branch
          %193 = sbr.rel (%p191) target = $region40
        $region39: #{tpu_custom_call.1} parent=35 // pred_region
          %195 = dma.done %s187, 512
        $region40: #{tpu_custom_call.1} parent=35 // pred_fallthru
          _
        %s196 = sand.u32 %s29, 1
        %s197 = scalar_lea.sflag [#allocation3], %s196
        %s198 = sand.u32 %s29, 1
        %s199 = smul.addr %s198, 32
        %s200 = scalar_lea.vmem [#allocation2], %s199
        %p201 = pneg %p42
        %p202 = pneg %p39
        %p203 = pneg %p63
        %p204 = pneg %p60
        %p205 = pneg %p84
        %p206 = pneg %p81
        %p207 = pneg %p105
        %p208 = pneg %p102
        %p209 = pneg %p131
        %p210 = pneg %p128
        %s211 = sand.u32 %s118, 1
        %s212 = scalar_lea.sflag [#allocation4], %s211
        %s213 = sand.u32 %s118, 1
        %s214 = smul.addr %s213, 24
        %s215 = scalar_lea.vmem [#allocation5], %s214
        %v216 = vld [vmem:[%s190] sm:$0xff]
        %v217 = vld [vmem:[%s190 + $0x8] sm:$0xff]
        %v218 = vld [vmem:[%s190 + $0x10] sm:$0xff]
        %v219 = vld [vmem:[%s190 + $0x18] sm:$0xff]
        %v220 = vld [vmem:[%s1] sm:$0xff]
        %v221 = vld [vmem:[%s1 + $0x8] sm:$0xff]
        %vm222 = vcmask 64512
        %v224 = vsel %vm222, %v220, 0
        %v227 = vsel %vm222, %v221, 0
        %229 = vmatpush.msra.mxu0 0.0
        %230 = vmatpush.msra.mxu0 0.0
        %231 = vmatpush.msra.mxu0 0.0
        %232 = vmatpush.msra.mxu0 0.0
        %233 = vmatpush.msra.mxu0 0.0
        %234 = vmatpush.msra.mxu0 0.0
        %235 = vmatpush.msra.mxu0 0.0
        %236 = vmatpush.msra.mxu0 0.0
        %237 = vmatpush.msra.mxu0 0.0
        %238 = vmatpush.msra.mxu0 0.0
        %239 = vmatpush.msra.mxu0 0.0
        %240 = vmatpush.msra.mxu0 0.0
        %241 = vmatpush.msra.mxu0 0.0
        %242 = vmatpush.msra.mxu0 0.0
        %243 = vmatpush.msra.mxu0 0.0
        %244 = vmatpush.msra.mxu0 %v216
        %245 = vmatmul.f32.gmra.mxu0 %v224
        %v246 = vpop.f32.mrf.mxu0
        %v247 = vadd.f32 0.0, %v246
        %248 = vmatmul.f32.gmra.mxu0 %v227
        %v249 = vpop.f32.mrf.mxu0
        %v250 = vadd.f32 0.0, %v249
        %251 = vdwg.mxu0
        %252 = vmatpush.msra.mxu0 0.0
        %253 = vmatpush.msra.mxu0 0.0
        %254 = vmatpush.msra.mxu0 0.0
        %255 = vmatpush.msra.mxu0 0.0
        %256 = vmatpush.msra.mxu0 0.0
        %257 = vmatpush.msra.mxu0 0.0
        %258 = vmatpush.msra.mxu0 0.0
        %259 = vmatpush.msra.mxu0 0.0
        %260 = vmatpush.msra.mxu0 0.0
        %261 = vmatpush.msra.mxu0 0.0
        %262 = vmatpush.msra.mxu0 0.0
        %263 = vmatpush.msra.mxu0 0.0
        %264 = vmatpush.msra.mxu0 0.0
        %265 = vmatpush.msra.mxu0 0.0
        %266 = vmatpush.msra.mxu0 0.0
        %267 = vmatpush.msra.mxu0 %v217
        %268 = vmatmul.f32.gmra.mxu0 %v224
        %v269 = vpop.f32.mrf.mxu0
        %v270 = vadd.f32 0.0, %v269
        %271 = vmatmul.f32.gmra.mxu0 %v227
        %v272 = vpop.f32.mrf.mxu0
        %v273 = vadd.f32 0.0, %v272
        %274 = vdwg.mxu0
        %275 = vmatpush.msra.mxu0 0.0
        %276 = vmatpush.msra.mxu0 0.0
        %277 = vmatpush.msra.mxu0 0.0
        %278 = vmatpush.msra.mxu0 0.0
        %279 = vmatpush.msra.mxu0 0.0
        %280 = vmatpush.msra.mxu0 0.0
        %281 = vmatpush.msra.mxu0 0.0
        %282 = vmatpush.msra.mxu0 0.0
        %283 = vmatpush.msra.mxu0 0.0
        %284 = vmatpush.msra.mxu0 0.0
        %285 = vmatpush.msra.mxu0 0.0
        %286 = vmatpush.msra.mxu0 0.0
        %287 = vmatpush.msra.mxu0 0.0
        %288 = vmatpush.msra.mxu0 0.0
        %289 = vmatpush.msra.mxu0 0.0
        %290 = vmatpush.msra.mxu0 %v218
        %291 = vmatmul.f32.gmra.mxu0 %v224
        %v292 = vpop.f32.mrf.mxu0
        %v293 = vadd.f32 0.0, %v292
        %294 = vmatmul.f32.gmra.mxu0 %v227
        %v295 = vpop.f32.mrf.mxu0
        %v296 = vadd.f32 0.0, %v295
        %297 = vdwg.mxu0
        %298 = vmatpush.msra.mxu0 0.0
        %299 = vmatpush.msra.mxu0 0.0
        %300 = vmatpush.msra.mxu0 0.0
        %301 = vmatpush.msra.mxu0 0.0
        %302 = vmatpush.msra.mxu0 0.0
        %303 = vmatpush.msra.mxu0 0.0
        %304 = vmatpush.msra.mxu0 0.0
        %305 = vmatpush.msra.mxu0 0.0
        %306 = vmatpush.msra.mxu0 0.0
        %307 = vmatpush.msra.mxu0 0.0
        %308 = vmatpush.msra.mxu0 0.0
        %309 = vmatpush.msra.mxu0 0.0
        %310 = vmatpush.msra.mxu0 0.0
        %311 = vmatpush.msra.mxu0 0.0
        %312 = vmatpush.msra.mxu0 0.0
        %313 = vmatpush.msra.mxu0 %v219
        %314 = vmatmul.f32.gmra.mxu0 %v224
        %v315 = vpop.f32.mrf.mxu0
        %v316 = vadd.f32 0.0, %v315
        %317 = vmatmul.f32.gmra.mxu0 %v227
        %v318 = vpop.f32.mrf.mxu0
        %v319 = vadd.f32 0.0, %v318
        %320 = vdwg.mxu0
        %v321 = vmax.f32 %v247, 0.0
        %v322 = vmax.f32 %v270, 0.0
        %v323 = vmax.f32 %v293, 0.0
        %v324 = vmax.f32 %v316, 0.0
        %329 = vrot.lane.b32.xlu0 %v321, 127
        %v330 = vpop.permute.xlu0 %329
        %331 = vrot.lane.b32.xlu0 %v322, 127
        %v332 = vpop.permute.xlu0 %331
        %333 = vrot.lane.b32.xlu0 %v323, 127
        %v334 = vpop.permute.xlu0 %333
        %335 = vrot.lane.b32.xlu0 %v324, 127
        %v336 = vpop.permute.xlu0 %335
        %vm337 = vcmask 1039360
        %v338 = vsel %vm337, %v330, %v332
        %v339 = vsel %vm337, %v332, %v334
        %v340 = vsel %vm337, %v334, %v336
        %344 = vrot.lane.b32.xlu0 %v321, 126
        %v345 = vpop.permute.xlu0 %344
        %346 = vrot.lane.b32.xlu0 %v322, 126
        %v347 = vpop.permute.xlu0 %346
        %348 = vrot.lane.b32.xlu0 %v323, 126
        %v349 = vpop.permute.xlu0 %348
        %350 = vrot.lane.b32.xlu0 %v324, 126
        %v351 = vpop.permute.xlu0 %350
        %vm352 = vcmask 1031168
        %v353 = vsel %vm352, %v345, %v347
        %v354 = vsel %vm352, %v347, %v349
        %v355 = vsel %vm352, %v349, %v351
        %359 = vrot.lane.b32.xlu0 %v321, 110
        %v360 = vpop.permute.xlu0 %359
        %361 = vrot.lane.b32.xlu0 %v322, 110
        %v362 = vpop.permute.xlu0 %361
        %363 = vrot.lane.b32.xlu0 %v323, 110
        %v364 = vpop.permute.xlu0 %363
        %365 = vrot.lane.b32.xlu0 %v324, 110
        %v366 = vpop.permute.xlu0 %365
        %vm367 = vcmask 900096
        %v368 = vsel %vm367, %v360, %v362
        %v369 = vsel %vm367, %v362, %v364
        %v370 = vsel %vm367, %v364, %v366
        %374 = vrot.lane.b32.xlu0 %v321, 109
        %v375 = vpop.permute.xlu0 %374
        %376 = vrot.lane.b32.xlu0 %v322, 109
        %v377 = vpop.permute.xlu0 %376
        %378 = vrot.lane.b32.xlu0 %v323, 109
        %v379 = vpop.permute.xlu0 %378
        %380 = vrot.lane.b32.xlu0 %v324, 109
        %v381 = vpop.permute.xlu0 %380
        %vm382 = vcmask 891904
        %v383 = vsel %vm382, %v375, %v377
        %v384 = vsel %vm382, %v377, %v379
        %v385 = vsel %vm382, %v379, %v381
        %389 = vrot.lane.b32.xlu0 %v321, 108
        %v390 = vpop.permute.xlu0 %389
        %391 = vrot.lane.b32.xlu0 %v322, 108
        %v392 = vpop.permute.xlu0 %391
        %393 = vrot.lane.b32.xlu0 %v323, 108
        %v394 = vpop.permute.xlu0 %393
        %395 = vrot.lane.b32.xlu0 %v324, 108
        %v396 = vpop.permute.xlu0 %395
        %vm397 = vcmask 883712
        %v398 = vsel %vm397, %v390, %v392
        %v399 = vsel %vm397, %v392, %v394
        %v400 = vsel %vm397, %v394, %v396
        %404 = vrot.lane.b32.xlu0 %v321, 92
        %v405 = vpop.permute.xlu0 %404
        %406 = vrot.lane.b32.xlu0 %v322, 92
        %v407 = vpop.permute.xlu0 %406
        %408 = vrot.lane.b32.xlu0 %v323, 92
        %v409 = vpop.permute.xlu0 %408
        %410 = vrot.lane.b32.xlu0 %v324, 92
        %v411 = vpop.permute.xlu0 %410
        %vm412 = vcmask 752640
        %v413 = vsel %vm412, %v405, %v407
        %v414 = vsel %vm412, %v407, %v409
        %v415 = vsel %vm412, %v409, %v411
        %419 = vrot.lane.b32.xlu0 %v321, 91
        %v420 = vpop.permute.xlu0 %419
        %421 = vrot.lane.b32.xlu0 %v322, 91
        %v422 = vpop.permute.xlu0 %421
        %423 = vrot.lane.b32.xlu0 %v323, 91
        %v424 = vpop.permute.xlu0 %423
        %425 = vrot.lane.b32.xlu0 %v324, 91
        %v426 = vpop.permute.xlu0 %425
        %vm427 = vcmask 744448
        %v428 = vsel %vm427, %v420, %v422
        %v429 = vsel %vm427, %v422, %v424
        %v430 = vsel %vm427, %v424, %v426
        %434 = vrot.lane.b32.xlu0 %v321, 90
        %v435 = vpop.permute.xlu0 %434
        %436 = vrot.lane.b32.xlu0 %v322, 90
        %v437 = vpop.permute.xlu0 %436
        %438 = vrot.lane.b32.xlu0 %v323, 90
        %v439 = vpop.permute.xlu0 %438
        %440 = vrot.lane.b32.xlu0 %v324, 90
        %v441 = vpop.permute.xlu0 %440
        %vm442 = vcmask 736256
        %v443 = vsel %vm442, %v435, %v437
        %v444 = vsel %vm442, %v437, %v439
        %v445 = vsel %vm442, %v439, %v441
        %v449 = vld [vmem:[%s2] sm:$0xff]
        %vm450 = vcmask 588800
        %v452 = vsel %vm450, %v449, 0
        %454 = vmatpush.msra.mxu0 0.0
        %455 = vmatpush.msra.mxu0 0.0
        %456 = vmatpush.msra.mxu0 0.0
        %457 = vmatpush.msra.mxu0 0.0
        %458 = vmatpush.msra.mxu0 0.0
        %459 = vmatpush.msra.mxu0 0.0
        %460 = vmatpush.msra.mxu0 0.0
        %461 = vmatpush.msra.mxu0 %v443
        %462 = vmatpush.msra.mxu0 %v428
        %463 = vmatpush.msra.mxu0 %v413
        %464 = vmatpush.msra.mxu0 %v398
        %465 = vmatpush.msra.mxu0 %v383
        %466 = vmatpush.msra.mxu0 %v368
        %467 = vmatpush.msra.mxu0 %v353
        %468 = vmatpush.msra.mxu0 %v338
        %469 = vmatpush.msra.mxu0 %v321
        %470 = vmatmul.f32.gmra.mxu0 %v452
        %v471 = vpop.f32.mrf.mxu0
        %v472 = vadd.f32 0.0, %v471
        %473 = vdwg.mxu0
        %474 = vmatpush.msra.mxu0 0.0
        %475 = vmatpush.msra.mxu0 0.0
        %476 = vmatpush.msra.mxu0 0.0
        %477 = vmatpush.msra.mxu0 0.0
        %478 = vmatpush.msra.mxu0 0.0
        %479 = vmatpush.msra.mxu0 0.0
        %480 = vmatpush.msra.mxu0 0.0
        %481 = vmatpush.msra.mxu0 %v444
        %482 = vmatpush.msra.mxu0 %v429
        %483 = vmatpush.msra.mxu0 %v414
        %484 = vmatpush.msra.mxu0 %v399
        %485 = vmatpush.msra.mxu0 %v384
        %486 = vmatpush.msra.mxu0 %v369
        %487 = vmatpush.msra.mxu0 %v354
        %488 = vmatpush.msra.mxu0 %v339
        %489 = vmatpush.msra.mxu0 %v322
        %490 = vmatmul.f32.gmra.mxu0 %v452
        %v491 = vpop.f32.mrf.mxu0
        %v492 = vadd.f32 0.0, %v491
        %493 = vdwg.mxu0
        %494 = vmatpush.msra.mxu0 0.0
        %495 = vmatpush.msra.mxu0 0.0
        %496 = vmatpush.msra.mxu0 0.0
        %497 = vmatpush.msra.mxu0 0.0
        %498 = vmatpush.msra.mxu0 0.0
        %499 = vmatpush.msra.mxu0 0.0
        %500 = vmatpush.msra.mxu0 0.0
        %501 = vmatpush.msra.mxu0 %v445
        %502 = vmatpush.msra.mxu0 %v430
        %503 = vmatpush.msra.mxu0 %v415
        %504 = vmatpush.msra.mxu0 %v400
        %505 = vmatpush.msra.mxu0 %v385
        %506 = vmatpush.msra.mxu0 %v370
        %507 = vmatpush.msra.mxu0 %v355
        %508 = vmatpush.msra.mxu0 %v340
        %509 = vmatpush.msra.mxu0 %v323
        %510 = vmatmul.f32.gmra.mxu0 %v452
        %v511 = vpop.f32.mrf.mxu0
        %v512 = vadd.f32 0.0, %v511
        %513 = vdwg.mxu0
        %v514 = vmax.f32 %v472, 0.0
        %v515 = vmax.f32 %v492, 0.0
        %v516 = vmax.f32 %v512, 0.0
        %v517 = vld [vmem:[%s3] sm:$0xff]
        %522 = vrot.lane.b32.xlu0 %v250, 109
        %v523 = vpop.permute.xlu0 %522
        %524 = vrot.lane.b32.xlu0 %v273, 109
        %v525 = vpop.permute.xlu0 %524
        %526 = vrot.lane.b32.xlu0 %v296, 109
        %v527 = vpop.permute.xlu0 %526
        %528 = vrot.lane.b32.xlu0 %v319, 109
        %v529 = vpop.permute.xlu0 %528
        %v530 = vsel %vm382, %v523, %v525
        %v531 = vsel %vm382, %v525, %v527
        %v532 = vsel %vm382, %v527, %v529
        %v537 = vsel %vm222, %v517, 0
        %539 = vmatpush.msra.mxu0 0.0
        %540 = vmatpush.msra.mxu0 0.0
        %541 = vmatpush.msra.mxu0 0.0
        %542 = vmatpush.msra.mxu0 0.0
        %543 = vmatpush.msra.mxu0 0.0
        %544 = vmatpush.msra.mxu0 0.0
        %545 = vmatpush.msra.mxu0 0.0
        %546 = vmatpush.msra.mxu0 0.0
        %547 = vmatpush.msra.mxu0 0.0
        %548 = vmatpush.msra.mxu0 0.0
        %549 = vmatpush.msra.mxu0 0.0
        %550 = vmatpush.msra.mxu0 0.0
        %551 = vmatpush.msra.mxu0 0.0
        %552 = vmatpush.msra.mxu0 0.0
        %553 = vmatpush.msra.mxu0 0.0
        %554 = vmatpush.msra.mxu0 %v514
        %555 = vmatmul.f32.gmra.mxu0 %v537
        %v556 = vpop.f32.mrf.mxu0
        %v557 = vadd.f32 %v530, %v556
        %558 = vdwg.mxu0
        %559 = vmatpush.msra.mxu0 0.0
        %560 = vmatpush.msra.mxu0 0.0
        %561 = vmatpush.msra.mxu0 0.0
        %562 = vmatpush.msra.mxu0 0.0
        %563 = vmatpush.msra.mxu0 0.0
        %564 = vmatpush.msra.mxu0 0.0
        %565 = vmatpush.msra.mxu0 0.0
        %566 = vmatpush.msra.mxu0 0.0
        %567 = vmatpush.msra.mxu0 0.0
        %568 = vmatpush.msra.mxu0 0.0
        %569 = vmatpush.msra.mxu0 0.0
        %570 = vmatpush.msra.mxu0 0.0
        %571 = vmatpush.msra.mxu0 0.0
        %572 = vmatpush.msra.mxu0 0.0
        %573 = vmatpush.msra.mxu0 0.0
        %574 = vmatpush.msra.mxu0 %v515
        %575 = vmatmul.f32.gmra.mxu0 %v537
        %v576 = vpop.f32.mrf.mxu0
        %v577 = vadd.f32 %v531, %v576
        %578 = vdwg.mxu0
        %579 = vmatpush.msra.mxu0 0.0
        %580 = vmatpush.msra.mxu0 0.0
        %581 = vmatpush.msra.mxu0 0.0
        %582 = vmatpush.msra.mxu0 0.0
        %583 = vmatpush.msra.mxu0 0.0
        %584 = vmatpush.msra.mxu0 0.0
        %585 = vmatpush.msra.mxu0 0.0
        %586 = vmatpush.msra.mxu0 0.0
        %587 = vmatpush.msra.mxu0 0.0
        %588 = vmatpush.msra.mxu0 0.0
        %589 = vmatpush.msra.mxu0 0.0
        %590 = vmatpush.msra.mxu0 0.0
        %591 = vmatpush.msra.mxu0 0.0
        %592 = vmatpush.msra.mxu0 0.0
        %593 = vmatpush.msra.mxu0 0.0
        %594 = vmatpush.msra.mxu0 %v516
        %595 = vmatmul.f32.gmra.mxu0 %v537
        %v596 = vpop.f32.mrf.mxu0
        %v597 = vadd.f32 %v532, %v596
        %598 = vdwg.mxu0
        %599 = vst [vmem:[%s215] sm:$0xff] %v557
        %600 = vst [vmem:[%s215 + $0x8] sm:$0xff] %v577
        %601 = vst [vmem:[%s215 + $0x10] sm:$0xff] %v597
        %s602 = sand.u32 %s118, 1
        %s603 = scalar_lea.sflag [#allocation4], %s602
        %s604 = sand.u32 %s118, 1
        %s605 = smul.addr %s604, 24
        %s606 = scalar_lea.vmem [#allocation5], %s605
        // Predicated region
        $region41: #{tpu_custom_call.1} parent=35 // pred_check
          %p607 = pneg %p128
        $region42: #{tpu_custom_call.1} parent=35 // pred_check_branch
          %609 = sbr.rel (%p607) target = $region44
        $region43: #{tpu_custom_call.1} parent=35 // pred_region
          %611 = vsyncadd %s603, 0
          %s612 = smul.addr %s21, 3
          %s613 = smul.addr %s612, 8
          %s614 = scalar_lea.hbm %s4, %s613
          %s616 = sshll.u32 %s606, 4
          %s617 = int_to_ptr.vmem [resolvable:$true] %s616
          %s618 = sshll.u32 %s614, 4
          %s619 = int_to_ptr.hbm [resolvable:$true] %s618
          %621 = dma.vmem_to_hbm [thread:$0]  %s617, 384, %s619, %s603
        $region44: #{tpu_custom_call.1} parent=35 // pred_fallthru
          _
      $region36: #{tpu_custom_call.1} parent=5 // pred_fallthru
        _
      %p622 = scmp.le.s32.totalorder 2, %s16
      // Predicated region
      $region45: #{tpu_custom_call.1} parent=5 // pred_check
        %p623 = pneg %p622
      $region46: #{tpu_custom_call.1} parent=5 // pred_check_branch
        %625 = sbr.rel (%p623) target = $region48
      $region47: #{tpu_custom_call.1} parent=5 // pred_region
        %s626 = ssub.s32 %s16, 2
        // Predicated region
        $region49: #{tpu_custom_call.1} parent=47 // pred_check
          %p627 = pneg %p134
        $region50: #{tpu_custom_call.1} parent=47 // pred_check_branch
          %629 = sbr.rel (%p627) target = $region52
        $region51: #{tpu_custom_call.1} parent=47 // pred_region
          %s630 = sand.u32 %s119, 1
          %s631 = scalar_lea.sflag [#allocation4], %s630
          %s632 = sand.u32 %s119, 1
          %s633 = smul.addr %s632, 24
          %s634 = scalar_lea.vmem [#allocation5], %s633
          %636 = dma.done %s631, 384
        $region52: #{tpu_custom_call.1} parent=47 // pred_fallthru
          _
      $region48: #{tpu_custom_call.1} parent=5 // pred_fallthru
        _
    $region6: #{tpu_custom_call.1} parent=1 // loop_footer
      %s20 = sadd.s32 1, %s16
    $region7: #{tpu_custom_call.1} parent=1 // loop_footer_branch
      %15 = sbr.rel target = $region3
    $region8: #{tpu_custom_call.1} parent=1 // loop_exit
      _
    %637 = vsyncpa [#allocation3], 1
    %s638 = scalar_lea.sflag [#allocation3], 1
    %639 = vsyncpa %s638, 1
    %640 = vsyncpa [#allocation4], 1
    %s641 = scalar_lea.sflag [#allocation4], 1
    %642 = vsyncpa %s641, 1

</llo_original>
